<compile_context>
chip_gen: v7x
topology: tpu7x:2x2x1
jax: 0.10.0
libtpu: 0.0.40
codegen_flags: <defaults>
</compile_context>

<pallas_src>
import jax
import jax.numpy as jnp
from jax.experimental import pallas as pl
from jax.experimental.pallas import tpu as pltpu

_LANES = 128
_SUBLANES = 8


def _fusion_kernel(wseg_ref, wbnd_ref, bias_ref, seg_ref, bnd_ref, out_ref):
    # seg_ref / bnd_ref / out_ref : (C, rows_tile, 128) VMEM tiles.
    # wseg_ref / wbnd_ref         : (C, 1, 1) f32 VMEM 1x1-conv weight columns.
    # bias_ref                    : (1, 1)  f32 SMEM conv bias.
    seg = seg_ref[...]                      # native dtype, full (8,128) vregs
    bnd = bnd_ref[...]

    # Per-pixel 1x1-conv logit over concat([seg, bnd]) channels:
    # full-vreg VPU FMAs + a reduce over the leading (channel) block axis.
    # Accumulate in f32 regardless of input dtype.
    w_seg = wseg_ref[...]                   # (C, 1, 1) f32, one hoisted broadcast
    w_bnd = wbnd_ref[...]
    prod = w_seg * seg.astype(jnp.float32) + w_bnd * bnd.astype(jnp.float32)
    logit = jnp.sum(prod, axis=0, keepdims=True) + bias_ref[0, 0]   # (1, rows, 128)

    att = jax.nn.sigmoid(logit).astype(seg.dtype)                   # EUP

    # seg*att + bnd*(1-att) == bnd + att*(seg-bnd); blend in input dtype.
    out = bnd + att * (seg - bnd)           # att broadcasts over channel axis (free)
    out_ref[...] = out.astype(out_ref.dtype)  # one lane-dense full-tile store


def attention_fusion_pallas(seg_nchw, bnd_nchw, conv_w, conv_b, *,
                            target_tile_bytes=2 << 20):
    """seg_nchw, bnd_nchw: (N, C, H, W).
    conv_w: (1, 2C, 1, 1), conv_b: (1,) -- Conv2d(2C, 1, kernel_size=1) params.
    Returns (N, C, H, W)."""
    N, C, H, W = seg_nchw.shape
    P = H * W
    dtype = seg_nchw.dtype
    itemsize = jnp.dtype(dtype).itemsize

    # --- layout: (N, C, P) -> (N, C, R, 128), pixels fill lanes + sublanes ---
    P_pad = pl.cdiv(P, _LANES) * _LANES
    seg3 = seg_nchw.reshape(N, C, P)
    bnd3 = bnd_nchw.reshape(N, C, P)
    if P_pad != P:
        # Only taken when H*W is not a multiple of 128 (one extra HBM copy).
        pad = ((0, 0), (0, 0), (0, P_pad - P))
        seg3 = jnp.pad(seg3, pad)
        bnd3 = jnp.pad(bnd3, pad)
    R = P_pad // _LANES
    seg4 = seg3.reshape(N, C, R, _LANES)
    bnd4 = bnd3.reshape(N, C, R, _LANES)

    # --- 1x1-conv parameters: seg half / boundary half as (C,1,1) columns ---
    w = conv_w.reshape(2 * C).astype(jnp.float32)
    w_seg = w[:C].reshape(C, 1, 1)
    w_bnd = w[C:].reshape(C, 1, 1)
    bias = conv_b.reshape(1, 1).astype(jnp.float32)

    # --- row-tile size: multiple of 8 sublanes, ~target_tile_bytes / input ---
    bytes_per_row = C * _LANES * itemsize
    rows_budget = max(_SUBLANES,
                      (target_tile_bytes // bytes_per_row) // _SUBLANES * _SUBLANES)
    rows_tile = R if R <= rows_budget else rows_budget
    n_row_tiles = pl.cdiv(R, rows_tile)

    # Prefer an even total grid-step count so both v7x TensorCores get work.
    if (N * n_row_tiles) % 2 == 1 and R >= 2 * _SUBLANES:
        cand = max(_SUBLANES,
                   pl.cdiv(pl.cdiv(R, n_row_tiles + 1), _SUBLANES) * _SUBLANES)
        if (N * pl.cdiv(R, cand)) % 2 == 0:
            rows_tile = cand
            n_row_tiles = pl.cdiv(R, cand)

    grid = (N, n_row_tiles)
    data_spec = pl.BlockSpec((None, C, rows_tile, _LANES),
                             lambda n, j: (n, 0, j, 0))
    w_spec = pl.BlockSpec((C, 1, 1), lambda n, j: (0, 0, 0))
    bias_spec = pl.BlockSpec((1, 1), lambda n, j: (0, 0),
                             memory_space=pltpu.SMEM)

    # --- VMEM limit derived from the actual footprint (+ temp headroom) ---
    padded_rows = pl.cdiv(rows_tile, _SUBLANES) * _SUBLANES
    tile_bytes = C * padded_rows * _LANES * itemsize        # per buffered io tile
    tile_bytes_f32 = C * padded_rows * _LANES * 4           # f32 temporaries
    vmem_limit = 3 * 2 * tile_bytes + 6 * tile_bytes_f32 + (4 << 20)
    vmem_limit = int(min(max(vmem_limit, 8 << 20), 56 << 20))

    out4 = pl.pallas_call(
        _fusion_kernel,
        out_shape=jax.ShapeDtypeStruct((N, C, R, _LANES), dtype),
        grid_spec=pltpu.PrefetchScalarGridSpec(
            num_scalar_prefetch=0,
            grid=grid,
            in_specs=[
                w_spec,        # w_seg (C,1,1) f32 VMEM
                w_spec,        # w_bnd (C,1,1) f32 VMEM
                bias_spec,     # bias  (1,1)   f32 SMEM
                data_spec,     # seg tile
                data_spec,     # boundary tile
            ],
            out_specs=pl.BlockSpec((None, C, rows_tile, _LANES),
                                   lambda n, j: (n, 0, j, 0)),
        ),
        compiler_params=pltpu.CompilerParams(
            dimension_semantics=("parallel", "parallel"),
            vmem_limit_bytes=vmem_limit),
    )(w_seg, w_bnd, bias, seg4, bnd4)

    out = out4.reshape(N, C, P_pad)
    if P_pad != P:
        out = out[:, :, :P]
    return out.reshape(N, C, H, W)


def attention_fusion_ref(seg, bnd, conv_w, conv_b):
    """Pure-JAX reference matching the PyTorch forward exactly (NCHW)."""
    combined = jnp.concatenate([seg, bnd], axis=1)              # (N, 2C, H, W)
    w = conv_w.reshape(1, -1, 1, 1)                             # (1, 2C, 1, 1)
    logit = jnp.sum(combined * w, axis=1, keepdims=True) + conv_b.reshape(1, 1, 1, 1)
    att = jax.nn.sigmoid(logit)                                 # (N, 1, H, W)
    return seg * att + bnd * (1 - att)


if __name__ == "__main__":
    key = jax.random.PRNGKey(0)
    k_seg, k_bnd, k_w, k_b = jax.random.split(key, 4)

    N, C, H, W = 2, 4, 16, 16
    seg = jax.random.normal(k_seg, (N, C, H, W), dtype=jnp.float32)
    bnd = jax.random.normal(k_bnd, (N, C, H, W), dtype=jnp.float32)

    # Deterministic Conv2d(2C, 1, kernel_size=1) parameters (synthetic init).
    fan_in = 2 * C
    bound = 1.0 / (fan_in ** 0.5)
    conv_w = jax.random.uniform(k_w, (1, 2 * C, 1, 1),
                                minval=-bound, maxval=bound, dtype=jnp.float32)
    conv_b = jax.random.uniform(k_b, (1,),
                                minval=-bound, maxval=bound, dtype=jnp.float32)

    out = attention_fusion_pallas(seg, bnd, conv_w, conv_b)
    out = jax.block_until_ready(out)

    ref = attention_fusion_ref(seg, bnd, conv_w, conv_b)
    assert out.shape == (N, C, H, W)
    assert jnp.allclose(out, ref, atol=1e-5, rtol=1e-5), "mismatch vs reference"

    print("KERNEL_OK")
</pallas_src>

<mosaic_0001>
module attributes {stable_mosaic.version = 11 : i64} {
  func.func @_fusion_kernel(%arg0: i32, %arg1: i32, %arg2: memref<4x1x1xf32, #tpu.memory_space<vmem>>, %arg3: memref<4x1x1xf32, #tpu.memory_space<vmem>>, %arg4: memref<1x1xf32, #tpu.memory_space<smem>>, %arg5: memref<1x4x2x128xf32, #tpu.memory_space<vmem>>, %arg6: memref<1x4x2x128xf32, #tpu.memory_space<vmem>>, %arg7: memref<1x4x2x128xf32, #tpu.memory_space<vmem>>) attributes {dimension_semantics = [#tpu.dimension_semantics<parallel>, #tpu.dimension_semantics<parallel>], iteration_bounds = array<i64: 2, 1>, scalar_prefetch = 0 : i64, scratch_operands = 0 : i64, tpu.core_type = #tpu.core_type<tc>, window_params = [{pipeline_mode = #tpu.pipeline_mode<synchronous>, transform_indices = @transform_0, window_bounds = array<i64: 4, 1, 1>}, {pipeline_mode = #tpu.pipeline_mode<synchronous>, transform_indices = @transform_1, window_bounds = array<i64: 4, 1, 1>}, {transform_indices = @transform_2, window_bounds = array<i64: 1, 1>}, {transform_indices = @transform_3, window_bounds = array<i64: 1, 4, 2, 128>}, {transform_indices = @transform_4, window_bounds = array<i64: 1, 4, 2, 128>}, {transform_indices = @transform_5, window_bounds = array<i64: 1, 4, 2, 128>}]} {
    %c0 = arith.constant 0 : index
    %c0_0 = arith.constant 0 : index
    %c0_1 = arith.constant 0 : index
    %c0_2 = arith.constant 0 : index
    %0 = vector.load %arg5[%c0, %c0_0, %c0_1, %c0_2] : memref<1x4x2x128xf32, #tpu.memory_space<vmem>>, vector<1x4x2x128xf32>
    %1 = vector.shape_cast %0 : vector<1x4x2x128xf32> to vector<4x2x128xf32>
    %c0_3 = arith.constant 0 : index
    %c0_4 = arith.constant 0 : index
    %c0_5 = arith.constant 0 : index
    %c0_6 = arith.constant 0 : index
    %2 = vector.load %arg6[%c0_3, %c0_4, %c0_5, %c0_6] : memref<1x4x2x128xf32, #tpu.memory_space<vmem>>, vector<1x4x2x128xf32>
    %3 = vector.shape_cast %2 : vector<1x4x2x128xf32> to vector<4x2x128xf32>
    %c0_7 = arith.constant 0 : index
    %c0_8 = arith.constant 0 : index
    %c0_9 = arith.constant 0 : index
    %4 = vector.load %arg2[%c0_7, %c0_8, %c0_9] : memref<4x1x1xf32, #tpu.memory_space<vmem>>, vector<4x1x1xf32>
    %c0_10 = arith.constant 0 : index
    %c0_11 = arith.constant 0 : index
    %c0_12 = arith.constant 0 : index
    %5 = vector.load %arg3[%c0_10, %c0_11, %c0_12] : memref<4x1x1xf32, #tpu.memory_space<vmem>>, vector<4x1x1xf32>
    %6 = vector.broadcast %4 : vector<4x1x1xf32> to vector<4x2x128xf32>
    %7 = arith.mulf %6, %1 : vector<4x2x128xf32>
    %8 = vector.broadcast %5 : vector<4x1x1xf32> to vector<4x2x128xf32>
    %9 = arith.mulf %8, %3 : vector<4x2x128xf32>
    %10 = arith.addf %7, %9 : vector<4x2x128xf32>
    %cst = arith.constant dense<0.000000e+00> : vector<2x128xf32>
    %11 = vector.multi_reduction <add>, %10, %cst [0] : vector<4x2x128xf32> to vector<2x128xf32>
    %12 = vector.shape_cast %11 : vector<2x128xf32> to vector<1x2x128xf32>
    %c0_13 = arith.constant 0 : index
    %c0_14 = arith.constant 0 : index
    %13 = memref.load %arg4[%c0_13, %c0_14] : memref<1x1xf32, #tpu.memory_space<smem>>
    %14 = vector.broadcast %13 : f32 to vector<1x2x128xf32>
    %15 = arith.addf %12, %14 : vector<1x2x128xf32>
    %16 = arith.negf %15 : vector<1x2x128xf32>
    %17 = math.exp %16 : vector<1x2x128xf32>
    %cst_15 = arith.constant 1.000000e+00 : f32
    %18 = vector.broadcast %cst_15 : f32 to vector<1x2x128xf32>
    %19 = arith.addf %18, %17 : vector<1x2x128xf32>
    %20 = arith.divf %18, %19 : vector<1x2x128xf32>
    %21 = arith.subf %1, %3 : vector<4x2x128xf32>
    %22 = vector.broadcast %20 : vector<1x2x128xf32> to vector<4x2x128xf32>
    %23 = arith.mulf %22, %21 : vector<4x2x128xf32>
    %24 = arith.addf %3, %23 : vector<4x2x128xf32>
    %c0_16 = arith.constant 0 : index
    %c0_17 = arith.constant 0 : index
    %c0_18 = arith.constant 0 : index
    %c0_19 = arith.constant 0 : index
    %25 = vector.load %arg7[%c0_16, %c0_17, %c0_18, %c0_19] : memref<1x4x2x128xf32, #tpu.memory_space<vmem>>, vector<1x4x2x128xf32>
    %26 = vector.shape_cast %25 : vector<1x4x2x128xf32> to vector<4x2x128xf32>
    %27 = vector.shape_cast %24 : vector<4x2x128xf32> to vector<1x4x2x128xf32>
    tpu.vector_store %arg7[%c0_16, %c0_17, %c0_18, %c0_19], %27 {strides = array<i32>} : memref<1x4x2x128xf32, #tpu.memory_space<vmem>>, vector<1x4x2x128xf32>,
    return
  }
  func.func @transform_0(%arg0: i32, %arg1: i32) -> (i32, i32, i32) {
    %c0_i32 = arith.constant 0 : i32
    %c0_i32_0 = arith.constant 0 : i32
    %c0_i32_1 = arith.constant 0 : i32
    %c0_i32_2 = arith.constant 0 : i32
    return %c0_i32, %c0_i32_0, %c0_i32_1 : i32, i32, i32
  }
  func.func @transform_1(%arg0: i32, %arg1: i32) -> (i32, i32, i32) {
    %c0_i32 = arith.constant 0 : i32
    %c0_i32_0 = arith.constant 0 : i32
    %c0_i32_1 = arith.constant 0 : i32
    %c0_i32_2 = arith.constant 0 : i32
    return %c0_i32, %c0_i32_0, %c0_i32_1 : i32, i32, i32
  }
  func.func @transform_2(%arg0: i32, %arg1: i32) -> (i32, i32) {
    %c0_i32 = arith.constant 0 : i32
    %c0_i32_0 = arith.constant 0 : i32
    %c0_i32_1 = arith.constant 0 : i32
    return %c0_i32, %c0_i32_0 : i32, i32
  }
  func.func @transform_3(%arg0: i32, %arg1: i32) -> (i32, i32, i32, i32) {
    %c0_i32 = arith.constant 0 : i32
    %c0_i32_0 = arith.constant 0 : i32
    %c0_i32_1 = arith.constant 0 : i32
    return %arg0, %c0_i32, %arg1, %c0_i32_0 : i32, i32, i32, i32
  }
  func.func @transform_4(%arg0: i32, %arg1: i32) -> (i32, i32, i32, i32) {
    %c0_i32 = arith.constant 0 : i32
    %c0_i32_0 = arith.constant 0 : i32
    %c0_i32_1 = arith.constant 0 : i32
    return %arg0, %c0_i32, %arg1, %c0_i32_0 : i32, i32, i32, i32
  }
  func.func @transform_5(%arg0: i32, %arg1: i32) -> (i32, i32, i32, i32) {
    %c0_i32 = arith.constant 0 : i32
    %c0_i32_0 = arith.constant 0 : i32
    %c0_i32_1 = arith.constant 0 : i32
    return %arg0, %c0_i32, %arg1, %c0_i32_0 : i32, i32, i32, i32
  }
}

</mosaic_0001>

<llo_original>
// kernel: tpu_custom_call.1
$region0: #{tpu_custom_call.1}
  #allocation0 [shape = 'u32[]', space=smem, size = 0x4, offset = 0x4, fixed_abs, tag = 'smem constant byte address 0x4 - core index']
  #allocation1 [shape = 'u32[144,128]{1,0:T(1,128)}', space=vmem, size = 0x12000, scoped, tag = 'internal scratch']
  #allocation2 [shape = 'f32[1,1]{1,0:T(1,128)S(6)}', space=smem, size = 0x200, scoped, tag = 'scoped memory for tpu_custom_call.1']
  %s0 = inlined_call_operand.vmem [shape: f32[4,1,1], index: 0, kind: input, shape index: {}]
  %s1 = inlined_call_operand.vmem [shape: f32[4,1,1], index: 1, kind: input, shape index: {}]
  %s2 = inlined_call_operand.<no memory space> [shape: f32[1,1], index: 2, kind: input, shape index: {}]
  %s3 = inlined_call_operand.vmem [shape: f32[2,4,2,128], index: 3, kind: input, shape index: {}]
  %s4 = inlined_call_operand.hbm [shape: f32[2,4,2,128], index: 4, kind: input, shape index: {}]
  %s5 = inlined_call_operand.hbm [shape: f32[2,4,2,128], index: 5, kind: output, shape index: {}]
  %s6 = sld [smem:[#allocation0]]
  $region57: #{tpu_custom_call.1} parent=0
    _
  %s8 = ssub.s32 1, %s6
  %s9 = scalar_select 0, %s8, %s6
  %10 = sst [smem:[#allocation2]] %s2
  $region1: #{tpu_custom_call.1} parent=0
    #allocation3 [shape = 'u8[8192]{0}', space=vmem, size = 0x2000, scoped, tag = 'input window, operand 4']
    #allocation4 [shape = 's32[2]{0}', space=sflag, size = 0x8, scoped, tag = 'scoped memory for tpu_custom_call.1']
    #allocation5 [shape = 's32[2]{0}', space=sflag, size = 0x8, scoped, tag = 'scoped memory for tpu_custom_call.1']
    #allocation6 [shape = 'u8[8192]{0}', space=vmem, size = 0x2000, scoped, tag = 'output window, operand 0']
    %11 = vsyncpa [#allocation4], 0
    %s12 = scalar_lea.sflag [#allocation4], 1
    %13 = vsyncpa %s12, 0
    %14 = vsyncpa [#allocation5], 0
    %s15 = scalar_lea.sflag [#allocation5], 1
    %16 = vsyncpa %s15, 0
    loop: start=0, step=1, limit=4
    $region2: #{tpu_custom_call.1} parent=1 // loop_pre_header
      _
    $region3: #{tpu_custom_call.1} parent=1 // loop_header
      %s18 = sphi 0, %s22
      %p19 = scmp.ge.s32.totalorder %s18, 4
      %s25 = sphi 0, %s37
      %s26 = sphi 0, %s33
      %s27 = sphi 0, %s25
      %s28 = sphi 0, %s26
      %s29 = sphi 0, %s27
      %s30 = sphi 0, %s28
      %s38 = sphi 0, %s38
      %s40 = sphi 0, %s38
      %s41 = sphi 0, %s40
      %s55 = sphi 0, %s41
      %s59 = sphi 0, %s59
      %s61 = sphi 0, %s59
      %s62 = sphi 0, %s61
      %s76 = sphi 0, %s62
      %s80 = sphi 0, %s80
      %s82 = sphi 0, %s80
      %s83 = sphi 0, %s82
      %s97 = sphi 0, %s83
      %s105 = sphi 0, %s107
      %s108 = sphi 0, %s105
      %s109 = sphi 0, %s108
      %s125 = sphi 0, %s109
      %s133 = sphi 0, %s135
      %s136 = sphi 0, %s133
      %s137 = sphi 0, %s136
      %s153 = sphi 0, %s137
      %s161 = sphi 0, %s163
      %s164 = sphi 0, %s161
      %s165 = sphi 0, %s164
      %s181 = sphi 0, %s165
    $region4: #{tpu_custom_call.1} parent=1 // loop_header_branch
      %21 = sbr.rel (%p19) target = $region8
    $region5: #{tpu_custom_call.1} parent=1 // loop_body
      %s23 = ssub.s32 %s18, 1
      %s24 = ssub.s32 %s18, 2
      %s31 = sadd.s32 1, %s26
      %p32 = scmp.ge.s32.totalorder %s31, 1
      %s33 = scalar_select %p32, 0, %s31
      %s34 = sadd.s32 1, %s25
      %s35 = scalar_select %p32, %s34, %s25
      %p36 = scmp.ge.s32.totalorder %s35, 2
      %s37 = scalar_select %p36, 0, %s35
      %s39 = sadd.s32 %s38, 1
      %p42 = scmp.eq.s32.totalorder %s18, 1
      %p43 = scmp.ne.s32.totalorder %s38, %s40
      %p44 = scmp.eq.s32.totalorder %s18, 0
      %p45 = por %p43, %p44
      %p46 = scmp.ne.s32.totalorder %s38, %s40
      %p47 = scmp.eq.s32.totalorder %s23, 1
      %p48 = por %p46, %p47
      %p49 = scmp.ne.s32.totalorder %s40, %s41
      %p50 = scmp.eq.s32.totalorder %s23, 0
      %p51 = por %p49, %p50
      %p52 = scmp.ne.s32.totalorder %s40, %s41
      %p53 = scmp.eq.s32.totalorder %s24, 1
      %p54 = por %p52, %p53
      %p56 = scmp.ne.s32.totalorder %s41, %s55
      %p57 = scmp.eq.s32.totalorder %s24, 0
      %p58 = por %p56, %p57
      %s60 = sadd.s32 %s59, 1
      %p63 = scmp.eq.s32.totalorder %s18, 1
      %p64 = scmp.ne.s32.totalorder %s59, %s61
      %p65 = scmp.eq.s32.totalorder %s18, 0
      %p66 = por %p64, %p65
      %p67 = scmp.ne.s32.totalorder %s59, %s61
      %p68 = scmp.eq.s32.totalorder %s23, 1
      %p69 = por %p67, %p68
      %p70 = scmp.ne.s32.totalorder %s61, %s62
      %p71 = scmp.eq.s32.totalorder %s23, 0
      %p72 = por %p70, %p71
      %p73 = scmp.ne.s32.totalorder %s61, %s62
      %p74 = scmp.eq.s32.totalorder %s24, 1
      %p75 = por %p73, %p74
      %p77 = scmp.ne.s32.totalorder %s62, %s76
      %p78 = scmp.eq.s32.totalorder %s24, 0
      %p79 = por %p77, %p78
      %s81 = sadd.s32 %s80, 1
      %p84 = scmp.eq.s32.totalorder %s18, 1
      %p85 = scmp.ne.s32.totalorder %s80, %s82
      %p86 = scmp.eq.s32.totalorder %s18, 0
      %p87 = por %p85, %p86
      %p88 = scmp.ne.s32.totalorder %s80, %s82
      %p89 = scmp.eq.s32.totalorder %s23, 1
      %p90 = por %p88, %p89
      %p91 = scmp.ne.s32.totalorder %s82, %s83
      %p92 = scmp.eq.s32.totalorder %s23, 0
      %p93 = por %p91, %p92
      %p94 = scmp.ne.s32.totalorder %s82, %s83
      %p95 = scmp.eq.s32.totalorder %s24, 1
      %p96 = por %p94, %p95
      %p98 = scmp.ne.s32.totalorder %s83, %s97
      %p99 = scmp.eq.s32.totalorder %s24, 0
      %p100 = por %p98, %p99
      %s101 = ssub.s32 %s25, %s37
      %s102 = ssub.s32 %s26, %s33
      %s103 = sor.u32 %s101, %s102
      %p104 = scmp.eq.s32.totalorder %s103, 0
      %s106 = sadd.s32 %s105, 1
      %s107 = scalar_select %p104, %s105, %s106
      %p110 = pneg %p104
      %p111 = scmp.eq.s32.totalorder %s18, 1
      %p112 = por %p110, %p111
      %p113 = scmp.ne.s32.totalorder %s105, %s108
      %p114 = scmp.eq.s32.totalorder %s18, 0
      %p115 = por %p113, %p114
      %p116 = scmp.ne.s32.totalorder %s105, %s108
      %p117 = scmp.eq.s32.totalorder %s23, 1
      %p118 = por %p116, %p117
      %p119 = scmp.ne.s32.totalorder %s108, %s109
      %p120 = scmp.eq.s32.totalorder %s23, 0
      %p121 = por %p119, %p120
      %p122 = scmp.ne.s32.totalorder %s108, %s109
      %p123 = scmp.eq.s32.totalorder %s24, 1
      %p124 = por %p122, %p123
      %p126 = scmp.ne.s32.totalorder %s109, %s125
      %p127 = scmp.eq.s32.totalorder %s24, 0
      %p128 = por %p126, %p127
      %s129 = ssub.s32 %s25, %s37
      %s130 = ssub.s32 %s26, %s33
      %s131 = sor.u32 %s129, %s130
      %p132 = scmp.eq.s32.totalorder %s131, 0
      %s134 = sadd.s32 %s133, 1
      %s135 = scalar_select %p132, %s133, %s134
      %p138 = pneg %p132
      %p139 = scmp.eq.s32.totalorder %s18, 1
      %p140 = por %p138, %p139
      %p141 = scmp.ne.s32.totalorder %s133, %s136
      %p142 = scmp.eq.s32.totalorder %s18, 0
      %p143 = por %p141, %p142
      %p144 = scmp.ne.s32.totalorder %s133, %s136
      %p145 = scmp.eq.s32.totalorder %s23, 1
      %p146 = por %p144, %p145
      %p147 = scmp.ne.s32.totalorder %s136, %s137
      %p148 = scmp.eq.s32.totalorder %s23, 0
      %p149 = por %p147, %p148
      %p150 = scmp.ne.s32.totalorder %s136, %s137
      %p151 = scmp.eq.s32.totalorder %s24, 1
      %p152 = por %p150, %p151
      %p154 = scmp.ne.s32.totalorder %s137, %s153
      %p155 = scmp.eq.s32.totalorder %s24, 0
      %p156 = por %p154, %p155
      %s157 = ssub.s32 %s25, %s37
      %s158 = ssub.s32 %s26, %s33
      %s159 = sor.u32 %s157, %s158
      %p160 = scmp.eq.s32.totalorder %s159, 0
      %s162 = sadd.s32 %s161, 1
      %s163 = scalar_select %p160, %s161, %s162
      %p166 = pneg %p160
      %p167 = scmp.eq.s32.totalorder %s18, 1
      %p168 = por %p166, %p167
      %p169 = scmp.ne.s32.totalorder %s161, %s164
      %p170 = scmp.eq.s32.totalorder %s18, 0
      %p171 = por %p169, %p170
      %p172 = scmp.ne.s32.totalorder %s161, %s164
      %p173 = scmp.eq.s32.totalorder %s23, 1
      %p174 = por %p172, %p173
      %p175 = scmp.ne.s32.totalorder %s164, %s165
      %p176 = scmp.eq.s32.totalorder %s23, 0
      %p177 = por %p175, %p176
      %p178 = scmp.ne.s32.totalorder %s164, %s165
      %p179 = scmp.eq.s32.totalorder %s24, 1
      %p180 = por %p178, %p179
      %p182 = scmp.ne.s32.totalorder %s165, %s181
      %p183 = scmp.eq.s32.totalorder %s24, 0
      %p184 = por %p182, %p183
      %p185 = scmp.le.s32.totalorder 1, %s18
      %p186 = scmp.lt.s32.totalorder %s18, 3
      %p187 = pnand %p185, %p186
      %p188 = pneg %p187
      // Predicated region
      $region9: #{tpu_custom_call.1} parent=5 // pred_check
        _
      $region10: #{tpu_custom_call.1} parent=5 // pred_check_branch
        %190 = sbr.rel (%p187) target = $region12
      $region11: #{tpu_custom_call.1} parent=5 // pred_region
        %s191 = ssub.s32 %s18, 1
        // Predicated region
        $region13: #{tpu_custom_call.1} parent=11 // pred_check
          %p192 = pneg %p51
        $region14: #{tpu_custom_call.1} parent=11 // pred_check_branch
          %194 = sbr.rel (%p192) target = $region16
        $region15: #{tpu_custom_call.1} parent=11 // pred_region
          _
        $region16: #{tpu_custom_call.1} parent=11 // pred_fallthru
          _
        // Predicated region
        $region17: #{tpu_custom_call.1} parent=11 // pred_check
          %p195 = pneg %p72
        $region18: #{tpu_custom_call.1} parent=11 // pred_check_branch
          %197 = sbr.rel (%p195) target = $region20
        $region19: #{tpu_custom_call.1} parent=11 // pred_region
          _
        $region20: #{tpu_custom_call.1} parent=11 // pred_fallthru
          _
        // Predicated region
        $region21: #{tpu_custom_call.1} parent=11 // pred_check
          %p198 = pneg %p93
        $region22: #{tpu_custom_call.1} parent=11 // pred_check_branch
          %200 = sbr.rel (%p198) target = $region24
        $region23: #{tpu_custom_call.1} parent=11 // pred_region
          _
        $region24: #{tpu_custom_call.1} parent=11 // pred_fallthru
          _
      $region12: #{tpu_custom_call.1} parent=5 // pred_fallthru
        _
      %p201 = scmp.lt.s32.totalorder %s18, 2
      // Predicated region
      $region25: #{tpu_custom_call.1} parent=5 // pred_check
        %p202 = pneg %p201
      $region26: #{tpu_custom_call.1} parent=5 // pred_check_branch
        %204 = sbr.rel (%p202) target = $region28
      $region27: #{tpu_custom_call.1} parent=5 // pred_region
        // Predicated region
        $region29: #{tpu_custom_call.1} parent=27 // pred_check
          %p205 = pneg %p115
        $region30: #{tpu_custom_call.1} parent=27 // pred_check_branch
          %207 = sbr.rel (%p205) target = $region32
        $region31: #{tpu_custom_call.1} parent=27 // pred_region
          %p208 = scmp.lt.s32.totalorder %s25, 1
          %s209 = scalar_select %p208, %s25, 1
          %p210 = scmp.lt.s32.totalorder %s26, 0
          %s211 = scalar_select %p210, %s26, 0
          %s212 = smul.addr %s209, 4
          %s213 = sadd.s32 %s211, %s212
          %s214 = smul.addr %s213, 2
          %s215 = scalar_lea.vmem %s3, %s214
        $region32: #{tpu_custom_call.1} parent=27 // pred_fallthru
          _
        // Predicated region
        $region33: #{tpu_custom_call.1} parent=27 // pred_check
          %p216 = pneg %p143
        $region34: #{tpu_custom_call.1} parent=27 // pred_check_branch
          %218 = sbr.rel (%p216) target = $region36
        $region35: #{tpu_custom_call.1} parent=27 // pred_region
          %s219 = sand.u32 %s133, 1
          %s220 = scalar_lea.sflag [#allocation4], %s219
          %s221 = sand.u32 %s133, 1
          %s222 = smul.addr %s221, 8
          %s223 = scalar_lea.vmem [#allocation3], %s222
          %s225 = ssub.s32 128, 128
          %226 = vsyncadd %s220, %s225
          %s227 = smul.addr %s25, 4
          %s228 = sadd.s32 %s26, %s227
          %s229 = smul.addr %s228, 32
          %s230 = scalar_lea.hbm %s4, %s229
          %s231 = sshll.u32 %s223, 4
          %s232 = int_to_ptr.vmem [resolvable:$true] %s231
          %237 = dma.hbm_to_vmem [thread:$0]  %s230, 128, %s232, %s220, 32, 32, 2
        $region36: #{tpu_custom_call.1} parent=27 // pred_fallthru
          _
      $region28: #{tpu_custom_call.1} parent=5 // pred_fallthru
        _
      %p238 = scmp.le.s32.totalorder 1, %s18
      %p239 = scmp.lt.s32.totalorder %s18, 3
      %p240 = pnand %p238, %p239
      %p241 = pneg %p240
      // Predicated region
      $region37: #{tpu_custom_call.1} parent=5 // pred_check
        _
      $region38: #{tpu_custom_call.1} parent=5 // pred_check_branch
        %243 = sbr.rel (%p240) target = $region40
      $region39: #{tpu_custom_call.1} parent=5 // pred_region
        %s244 = ssub.s32 %s18, 1
        %s245 = sand.u32 %s136, 1
        %s246 = scalar_lea.sflag [#allocation4], %s245
        %s247 = sand.u32 %s136, 1
        %s248 = smul.addr %s247, 8
        %s249 = scalar_lea.vmem [#allocation3], %s248
        // Predicated region
        $region41: #{tpu_custom_call.1} parent=39 // pred_check
          %p250 = pneg %p149
        $region42: #{tpu_custom_call.1} parent=39 // pred_check_branch
          %252 = sbr.rel (%p250) target = $region44
        $region43: #{tpu_custom_call.1} parent=39 // pred_region
          %253 = dma.done %s246, 128
        $region44: #{tpu_custom_call.1} parent=39 // pred_fallthru
          _
        %p254 = pneg %p51
        %p255 = pneg %p48
        %p256 = pneg %p72
        %p257 = pneg %p69
        %p258 = pneg %p93
        %p259 = pneg %p90
        %p260 = scmp.lt.s32.totalorder %s27, 1
        %s261 = scalar_select %p260, %s27, 1
        %p262 = scmp.lt.s32.totalorder %s28, 0
        %s263 = scalar_select %p262, %s28, 0
        %s264 = smul.addr %s261, 4
        %s265 = sadd.s32 %s263, %s264
        %s266 = smul.addr %s265, 2
        %s267 = scalar_lea.vmem %s3, %s266
        %p268 = pneg %p121
        %p269 = pneg %p118
        %s270 = sand.u32 %s136, 1
        %s271 = scalar_lea.sflag [#allocation4], %s270
        %s272 = sand.u32 %s136, 1
        %s273 = smul.addr %s272, 8
        %s274 = scalar_lea.vmem [#allocation3], %s273
        %p275 = pneg %p149
        %p276 = pneg %p146
        %p277 = pneg %p177
        %p278 = pneg %p174
        %s279 = sand.u32 %s164, 1
        %s280 = scalar_lea.sflag [#allocation5], %s279
        %s281 = sand.u32 %s164, 1
        %s282 = smul.addr %s281, 8
        %s283 = scalar_lea.vmem [#allocation6], %s282
        %p284 = scmp.lt.s32.totalorder %s27, 1
        %s285 = scalar_select %p284, %s27, 1
        %p286 = scmp.lt.s32.totalorder %s28, 0
        %s287 = scalar_select %p286, %s28, 0
        %s288 = smul.addr %s285, 4
        %s289 = sadd.s32 %s287, %s288
        %s290 = smul.addr %s289, 2
        %s291 = scalar_lea.vmem %s3, %s290
        %v292 = vld [vmem:[%s291] sm:$0x3]
        %v293 = vld [vmem:[%s291 + $0x2] sm:$0x3]
        %v294 = vld [vmem:[%s291 + $0x4] sm:$0x3]
        %v295 = vld [vmem:[%s291 + $0x6] sm:$0x3]
        %v296 = vld [vmem:[%s249] sm:$0x3]
        %v297 = vld [vmem:[%s249 + $0x2] sm:$0x3]
        %v298 = vld [vmem:[%s249 + $0x4] sm:$0x3]
        %v299 = vld [vmem:[%s249 + $0x6] sm:$0x3]
        %v300 = vld [vmem:[%s0] sm:$0x1]
        %v301 = vld [vmem:[%s0 + $0x1] sm:$0x1]
        %v302 = vld [vmem:[%s0 + $0x2] sm:$0x1]
        %v303 = vld [vmem:[%s0 + $0x3] sm:$0x1]
        %v304 = vld [vmem:[%s1] sm:$0x1]
        %v305 = vld [vmem:[%s1 + $0x1] sm:$0x1]
        %v306 = vld [vmem:[%s1 + $0x2] sm:$0x1]
        %v307 = vld [vmem:[%s1 + $0x3] sm:$0x1]
        %v312 = vlaneseq
        %v313 = vshrl.u32 %v312, 7
        %v314 = vsub.s32 0, %v313
        %v315 = vrot.slane %v300, %v314
        %v316 = vlaneseq
        %v317 = vshrl.u32 %v316, 7
        %v318 = vsub.s32 0, %v317
        %v319 = vrot.slane %v301, %v318
        %v320 = vlaneseq
        %v321 = vshrl.u32 %v320, 7
        %v322 = vsub.s32 0, %v321
        %v323 = vrot.slane %v302, %v322
        %v324 = vlaneseq
        %v325 = vshrl.u32 %v324, 7
        %v326 = vsub.s32 0, %v325
        %v327 = vrot.slane %v303, %v326
        %328 = vset.pattern.permute.xlu0 0
        %329 = vperm.xlu0 %328, %v315
        %v330 = vpop.permute.xlu0 %329
        %332 = vset.pattern.permute.xlu0 0
        %333 = vperm.xlu0 %332, %v319
        %v334 = vpop.permute.xlu0 %333
        %336 = vset.pattern.permute.xlu0 0
        %337 = vperm.xlu0 %336, %v323
        %v338 = vpop.permute.xlu0 %337
        %340 = vset.pattern.permute.xlu0 0
        %341 = vperm.xlu0 %340, %v327
        %v342 = vpop.permute.xlu0 %341
        %v344 = vmul.f32 %v330, %v292
        %v345 = vmul.f32 %v334, %v293
        %v346 = vmul.f32 %v338, %v294
        %v347 = vmul.f32 %v342, %v295
        %v352 = vlaneseq
        %v353 = vshrl.u32 %v352, 7
        %v354 = vsub.s32 0, %v353
        %v355 = vrot.slane %v304, %v354
        %v356 = vlaneseq
        %v357 = vshrl.u32 %v356, 7
        %v358 = vsub.s32 0, %v357
        %v359 = vrot.slane %v305, %v358
        %v360 = vlaneseq
        %v361 = vshrl.u32 %v360, 7
        %v362 = vsub.s32 0, %v361
        %v363 = vrot.slane %v306, %v362
        %v364 = vlaneseq
        %v365 = vshrl.u32 %v364, 7
        %v366 = vsub.s32 0, %v365
        %v367 = vrot.slane %v307, %v366
        %368 = vset.pattern.permute.xlu0 0
        %369 = vperm.xlu0 %368, %v355
        %v370 = vpop.permute.xlu0 %369
        %372 = vset.pattern.permute.xlu0 0
        %373 = vperm.xlu0 %372, %v359
        %v374 = vpop.permute.xlu0 %373
        %376 = vset.pattern.permute.xlu0 0
        %377 = vperm.xlu0 %376, %v363
        %v378 = vpop.permute.xlu0 %377
        %380 = vset.pattern.permute.xlu0 0
        %381 = vperm.xlu0 %380, %v367
        %v382 = vpop.permute.xlu0 %381
        %v384 = vmul.f32 %v370, %v296
        %v385 = vmul.f32 %v374, %v297
        %v386 = vmul.f32 %v378, %v298
        %v387 = vmul.f32 %v382, %v299
        %v388 = vadd.f32 %v344, %v384
        %v389 = vadd.f32 %v345, %v385
        %v390 = vadd.f32 %v346, %v386
        %v391 = vadd.f32 %v347, %v387
        %vm392 = vcmask 1041408
        %v393 = vsel %vm392, %v388, 0.0
        %v394 = vsel %vm392, %v389, 0.0
        %v395 = vadd.f32 %v393, %v394
        %v396 = vsel %vm392, %v390, 0.0
        %v397 = vadd.f32 %v395, %v396
        %v398 = vsel %vm392, %v391, 0.0
        %v399 = vadd.f32 %v397, %v398
        %s400 = sld [smem:[#allocation2]]
        %v401 = vstv %s400
        %v402 = vadd.f32 %v399, %v401
        %v403 = vxor.u32 %v402, 2147483648
        %v404 = vmul.f32 %v403, 1.442695
        %v405 = vpow.pop %v404
        %v406 = vadd.f32 %v405, 1.0
        %v407 = vrcp.pop %v406
        %v408 = vmul.f32 1.0, %v407
        %v409 = vsub.f32 %v292, %v296
        %v410 = vsub.f32 %v293, %v297
        %v411 = vsub.f32 %v294, %v298
        %v412 = vsub.f32 %v295, %v299
        %v413 = vmul.f32 %v408, %v409
        %v414 = vmul.f32 %v408, %v410
        %v415 = vmul.f32 %v408, %v411
        %v416 = vmul.f32 %v408, %v412
        %v417 = vadd.f32 %v296, %v413
        %v418 = vadd.f32 %v297, %v414
        %v419 = vadd.f32 %v298, %v415
        %v420 = vadd.f32 %v299, %v416
        %421 = vst [vmem:[%s283] sm:$0x3] %v417
        %422 = vst [vmem:[%s283 + $0x2] sm:$0x3] %v418
        %423 = vst [vmem:[%s283 + $0x4] sm:$0x3] %v419
        %424 = vst [vmem:[%s283 + $0x6] sm:$0x3] %v420
        %s425 = sand.u32 %s164, 1
        %s426 = scalar_lea.sflag [#allocation5], %s425
        %s427 = sand.u32 %s164, 1
        %s428 = smul.addr %s427, 8
        %s429 = scalar_lea.vmem [#allocation6], %s428
        // Predicated region
        $region45: #{tpu_custom_call.1} parent=39 // pred_check
          %p430 = pneg %p174
        $region46: #{tpu_custom_call.1} parent=39 // pred_check_branch
          %432 = sbr.rel (%p430) target = $region48
        $region47: #{tpu_custom_call.1} parent=39 // pred_region
          %s434 = ssub.s32 128, 128
          %435 = vsyncadd %s426, %s434
          %s436 = smul.addr %s27, 4
          %s437 = sadd.s32 %s28, %s436
          %s438 = smul.addr %s437, 32
          %s439 = scalar_lea.hbm %s5, %s438
          %s440 = sshll.u32 %s429, 4
          %s441 = int_to_ptr.vmem [resolvable:$true] %s440
          %446 = dma.vmem_to_hbm [thread:$0]  %s441, 128, %s439, %s426, 32, 32, 2
        $region48: #{tpu_custom_call.1} parent=39 // pred_fallthru
          _
      $region40: #{tpu_custom_call.1} parent=5 // pred_fallthru
        _
      %p447 = scmp.le.s32.totalorder 2, %s18
      // Predicated region
      $region49: #{tpu_custom_call.1} parent=5 // pred_check
        %p448 = pneg %p447
      $region50: #{tpu_custom_call.1} parent=5 // pred_check_branch
        %450 = sbr.rel (%p448) target = $region52
      $region51: #{tpu_custom_call.1} parent=5 // pred_region
        %s451 = ssub.s32 %s18, 2
        // Predicated region
        $region53: #{tpu_custom_call.1} parent=51 // pred_check
          %p452 = pneg %p180
        $region54: #{tpu_custom_call.1} parent=51 // pred_check_branch
          %454 = sbr.rel (%p452) target = $region56
        $region55: #{tpu_custom_call.1} parent=51 // pred_region
          %s455 = sand.u32 %s165, 1
          %s456 = scalar_lea.sflag [#allocation5], %s455
          %s457 = sand.u32 %s165, 1
          %s458 = smul.addr %s457, 8
          %s459 = scalar_lea.vmem [#allocation6], %s458
          %460 = dma.done %s456, 128
        $region56: #{tpu_custom_call.1} parent=51 // pred_fallthru
          _
      $region52: #{tpu_custom_call.1} parent=5 // pred_fallthru
        _
    $region6: #{tpu_custom_call.1} parent=1 // loop_footer
      %s22 = sadd.s32 1, %s18
    $region7: #{tpu_custom_call.1} parent=1 // loop_footer_branch
      %17 = sbr.rel target = $region3
    $region8: #{tpu_custom_call.1} parent=1 // loop_exit
      _
    %461 = vsyncpa [#allocation4], 1
    %s462 = scalar_lea.sflag [#allocation4], 1
    %463 = vsyncpa %s462, 1
    %464 = vsyncpa [#allocation5], 1
    %s465 = scalar_lea.sflag [#allocation5], 1
    %466 = vsyncpa %s465, 1

</llo_original>
